<compile_context>
chip_gen: v7x
topology: tpu7x:2x2x1
jax: 0.10.0
libtpu: 0.0.40
codegen_flags: <defaults>
</compile_context>

<pallas_src>
import jax
import jax.numpy as jnp
from jax import lax
from jax.experimental import pallas as pl
from jax.experimental.pallas import tpu as pltpu

LANE = 128        # vreg lane width
SUBLANE = 8       # f32 sublane height
MAX_TB = 2048     # batch-tile cap (rows)
VMEM_BUDGET = 16 * 1024 * 1024   # per-step double-buffered working-set budget (bytes)
SMALL_BATCH = 256                # below this, plain XLA beats pallas_call overhead


def _round_up(n, m):
    return ((n + m - 1) // m) * m


def _linear_kernel(x_ref, w_ref, b_ref, o_ref):
    # x_ref: (TB, D), w_ref: (O_pad, D), b_ref: (O_pad, 1), o_ref: (O_pad, TB)
    # NT matmul on the MXU (contract both operands on their last dim, q @ k.T form),
    # f32 accumulation; bias broadcast along lanes on the VPU.
    acc = lax.dot_general(
        w_ref[...], x_ref[...],
        dimension_numbers=(((1,), (1,)), ((), ())),
        preferred_element_type=jnp.float32,
    )
    o_ref[...] = (acc + b_ref[...]).astype(o_ref.dtype)


def prepare_params(weight, bias):
    """Pack PyTorch-layout params ONCE, outside the hot path.

    weight: (O, D), bias: (O,)  ->  w_packed: (O_pad, D), b_packed: (O_pad, 1)
    with O_pad = next multiple of 8 (sublane-aligned; O lives on sublanes, batch on lanes).
    """
    O, D = weight.shape
    o_pad = _round_up(max(O, 1), SUBLANE)
    w_packed = jnp.zeros((o_pad, D), weight.dtype).at[:O, :].set(weight)
    b_packed = jnp.zeros((o_pad, 1), bias.dtype).at[:O, 0].set(bias)
    return w_packed, b_packed


def _choose_batch_tile(B, D, o_pad):
    """Largest lane-aligned batch tile (multiple of 128, <= MAX_TB) whose double-buffered
    working set fits the VMEM budget, capped at ~half the batch so the grid has >= 2
    steps (keeps both v7x TensorCores busy via dimension_semantics="parallel")."""
    tb = MAX_TB
    # double-buffered x tile + double-buffered (transposed) output tile, f32
    while tb > LANE and 2 * tb * 4 * (D + o_pad) > VMEM_BUDGET:
        tb //= 2
    b_lanes = _round_up(B, LANE)
    if b_lanes >= 2 * LANE:
        tb = min(tb, _round_up(pl.cdiv(b_lanes, 2), LANE))
    else:
        tb = LANE
    return tb


def logistic_regression_forward(x, w_packed, b_packed, out_dim, *, use_pallas=None):
    """x: (B, D); w_packed: (O_pad, D); b_packed: (O_pad, 1)  ->  (B, out_dim) logits."""
    B, D = x.shape
    o_pad = w_packed.shape[0]

    if use_pallas is None:
        use_pallas = B >= SMALL_BATCH
    if not use_pallas:
        # Tiny problem: a single sub-us MXU op — pallas_call fixed overhead dominates.
        return (x @ w_packed.T + b_packed[:, 0])[:, :out_dim]

    tb = _choose_batch_tile(B, D, o_pad)
    grid = (pl.cdiv(B, tb),)

    # Per-step working set: double-buffered x tile + double-buffered output tile +
    # resident weight/bias (double-buffered by the default pipeliner; tiny for small D).
    est_vmem = 2 * tb * 4 * (D + o_pad) + 2 * 4 * (o_pad * D + o_pad)
    vmem_limit = int(min(32 << 20, max(int(1.25 * est_vmem) + (2 << 20), 8 << 20)))

    # TODO(synk): for very large input_dim (D >~ 3-4K on v7x, ~8K on v5e/v6e) add a K
    # grid axis ("arbitrary", last) with a VMEM f32 accumulator + pl.when init/finalize,
    # and mark the resident weight/bias specs pipeline_mode=pl.Buffered(1).

    out_t = pl.pallas_call(
        _linear_kernel,
        out_shape=jax.ShapeDtypeStruct((o_pad, B), x.dtype),
        grid_spec=pl.GridSpec(
            grid=grid,
            in_specs=[
                pl.BlockSpec((tb, D), lambda i: (i, 0)),        # x tile per grid step
                pl.BlockSpec((o_pad, D), lambda i: (0, 0)),     # weight stays resident
                pl.BlockSpec((o_pad, 1), lambda i: (0, 0)),     # bias stays resident
            ],
            out_specs=pl.BlockSpec((o_pad, tb), lambda i: (0, i)),  # lane-dense batch axis
        ),
        compiler_params=pltpu.CompilerParams(
            dimension_semantics=("parallel",),                  # shard batch across TCs
            vmem_limit_bytes=vmem_limit,
        ),
        cost_estimate=pl.CostEstimate(
            flops=2 * B * D * o_pad,
            transcendentals=0,
            bytes_accessed=4 * (B * D + o_pad * D + o_pad + o_pad * B),
        ),
    )(x, w_packed, b_packed)

    # (O_pad, B) -> (B, out_dim); transposing a tiny (out_dim, B) slab is a trivial XLA op.
    return out_t[:out_dim, :].T


if __name__ == "__main__":
    # Deterministic synthetic params mirroring nn.Linear(input_dim, 3).
    input_dim = 32
    output_dim = 3

    key = jax.random.PRNGKey(0)
    kw, kb, k1, k2, k3 = jax.random.split(key, 5)

    bound = 1.0 / jnp.sqrt(jnp.float32(input_dim))
    weight = jax.random.uniform(kw, (output_dim, input_dim), dtype=jnp.float32,
                                minval=-bound, maxval=bound)
    bias = jax.random.uniform(kb, (output_dim,), dtype=jnp.float32,
                              minval=-bound, maxval=bound)

    # Pack once (outside the hot path).
    w_packed, b_packed = prepare_params(weight, bias)

    def reference(x):
        return x @ weight.T + bias

    # (a) tiny batch -> XLA fast path (pallas_call overhead would dominate here).
    x_small = jax.random.normal(k1, (8, input_dim), dtype=jnp.float32)
    out_small = jax.block_until_ready(
        logistic_regression_forward(x_small, w_packed, b_packed, output_dim))
    assert out_small.shape == (8, output_dim)
    assert jnp.allclose(out_small, reference(x_small), atol=1e-4, rtol=1e-4)

    # (b) even batch -> Pallas kernel, grid of 2 tiles (shards across TCs on v7x).
    x_even = jax.random.normal(k2, (512, input_dim), dtype=jnp.float32)
    out_even = jax.block_until_ready(
        logistic_regression_forward(x_even, w_packed, b_packed, output_dim))
    assert out_even.shape == (512, output_dim)
    assert jnp.allclose(out_even, reference(x_even), atol=1e-4, rtol=1e-4)

    # (c) ragged batch -> Pallas kernel with a partially-valid last block (no wrapper pad).
    x_ragged = jax.random.normal(k3, (1037, input_dim), dtype=jnp.float32)
    out_ragged = jax.block_until_ready(
        logistic_regression_forward(x_ragged, w_packed, b_packed, output_dim))
    assert out_ragged.shape == (1037, output_dim)
    assert jnp.allclose(out_ragged, reference(x_ragged), atol=1e-4, rtol=1e-4)

    print("KERNEL_OK")
</pallas_src>

<mosaic_0001>
module attributes {stable_mosaic.version = 11 : i64} {
  func.func @_linear_kernel(%arg0: i32, %arg1: memref<256x32xf32, #tpu.memory_space<vmem>>, %arg2: memref<8x32xf32, #tpu.memory_space<vmem>>, %arg3: memref<8x1xf32, #tpu.memory_space<vmem>>, %arg4: memref<8x256xf32, #tpu.memory_space<vmem>>) attributes {dimension_semantics = [#tpu.dimension_semantics<parallel>], iteration_bounds = array<i64: 2>, scalar_prefetch = 0 : i64, scratch_operands = 0 : i64, tpu.core_type = #tpu.core_type<tc>, window_params = [{transform_indices = @transform_0, window_bounds = array<i64: 256, 32>}, {pipeline_mode = #tpu.pipeline_mode<synchronous>, transform_indices = @transform_1, window_bounds = array<i64: 8, 32>}, {pipeline_mode = #tpu.pipeline_mode<synchronous>, transform_indices = @transform_2, window_bounds = array<i64: 8, 1>}, {transform_indices = @transform_3, window_bounds = array<i64: 8, 256>}]} {
    %c0 = arith.constant 0 : index
    %c0_0 = arith.constant 0 : index
    %0 = vector.load %arg2[%c0, %c0_0] : memref<8x32xf32, #tpu.memory_space<vmem>>, vector<8x32xf32>
    %c0_1 = arith.constant 0 : index
    %c0_2 = arith.constant 0 : index
    %1 = vector.load %arg1[%c0_1, %c0_2] : memref<256x32xf32, #tpu.memory_space<vmem>>, vector<256x32xf32>
    %cst = arith.constant dense<0.000000e+00> : vector<8x256xf32>
    %2 = tpu.matmul %0, %1, %cst {dimension_numbers = #tpu.dot_dimension_numbers<[1], [1], [0], [0], [0, 0, 1, 0], [], []>} : vector<8x32xf32>, vector<256x32xf32>, vector<8x256xf32> -> vector<8x256xf32>
    %c0_3 = arith.constant 0 : index
    %c0_4 = arith.constant 0 : index
    %3 = vector.load %arg3[%c0_3, %c0_4] : memref<8x1xf32, #tpu.memory_space<vmem>>, vector<8x1xf32>
    %4 = vector.broadcast %3 : vector<8x1xf32> to vector<8x256xf32>
    %5 = arith.addf %2, %4 : vector<8x256xf32>
    %c0_5 = arith.constant 0 : index
    %c0_6 = arith.constant 0 : index
    %6 = vector.load %arg4[%c0_5, %c0_6] : memref<8x256xf32, #tpu.memory_space<vmem>>, vector<8x256xf32>
    tpu.vector_store %arg4[%c0_5, %c0_6], %5 {strides = array<i32>} : memref<8x256xf32, #tpu.memory_space<vmem>>, vector<8x256xf32>,
    return
  }
  func.func @transform_0(%arg0: i32) -> (i32, i32) {
    %c0_i32 = arith.constant 0 : i32
    %c0_i32_0 = arith.constant 0 : i32
    return %arg0, %c0_i32 : i32, i32
  }
  func.func @transform_1(%arg0: i32) -> (i32, i32) {
    %c0_i32 = arith.constant 0 : i32
    %c0_i32_0 = arith.constant 0 : i32
    %c0_i32_1 = arith.constant 0 : i32
    return %c0_i32, %c0_i32_0 : i32, i32
  }
  func.func @transform_2(%arg0: i32) -> (i32, i32) {
    %c0_i32 = arith.constant 0 : i32
    %c0_i32_0 = arith.constant 0 : i32
    %c0_i32_1 = arith.constant 0 : i32
    return %c0_i32, %c0_i32_0 : i32, i32
  }
  func.func @transform_3(%arg0: i32) -> (i32, i32) {
    %c0_i32 = arith.constant 0 : i32
    %c0_i32_0 = arith.constant 0 : i32
    return %c0_i32, %arg0 : i32, i32
  }
}

</mosaic_0001>

<llo_original>
// kernel: tpu_custom_call.1
$region0: #{tpu_custom_call.1}
  #allocation0 [shape = 'u32[]', space=smem, size = 0x4, offset = 0x4, fixed_abs, tag = 'smem constant byte address 0x4 - core index']
  #allocation1 [shape = 'u32[144,128]{1,0:T(1,128)}', space=vmem, size = 0x12000, scoped, tag = 'internal scratch']
  %s0 = inlined_call_operand.vmem [shape: f32[512,32], index: 0, kind: input, shape index: {}]
  %s1 = inlined_call_operand.vmem [shape: f32[8,32], index: 1, kind: input, shape index: {}]
  %s2 = inlined_call_operand.vmem [shape: f32[8,1], index: 2, kind: input, shape index: {}]
  %s3 = inlined_call_operand.hbm [shape: f32[8,512], index: 3, kind: output, shape index: {}]
  %s4 = sld [smem:[#allocation0]]
  $region45: #{tpu_custom_call.1} parent=0
    _
  %s6 = ssub.s32 1, %s4
  %s7 = scalar_select 0, %s6, %s4
  $region1: #{tpu_custom_call.1} parent=0
    #allocation2 [shape = 'u8[16384]{0}', space=vmem, size = 0x4000, scoped, tag = 'output window, operand 0']
    #allocation3 [shape = 's32[2]{0}', space=sflag, size = 0x8, scoped, tag = 'scoped memory for tpu_custom_call.1']
    %8 = vsyncpa [#allocation3], 0
    %s9 = scalar_lea.sflag [#allocation3], 1
    %10 = vsyncpa %s9, 0
    loop: start=0, step=1, limit=4
    $region2: #{tpu_custom_call.1} parent=1 // loop_pre_header
      _
    $region3: #{tpu_custom_call.1} parent=1 // loop_header
      %s12 = sphi 0, %s16
      %p13 = scmp.ge.s32.totalorder %s12, 4
      %s22 = sphi 0, %s24
      %s25 = sphi 0, %s22
      %s26 = sphi 0, %s25
      %s42 = sphi 0, %s26
      %s46 = sphi 0, %s46
      %s48 = sphi 0, %s46
      %s49 = sphi 0, %s48
      %s63 = sphi 0, %s49
      %s67 = sphi 0, %s67
      %s69 = sphi 0, %s67
      %s70 = sphi 0, %s69
      %s84 = sphi 0, %s70
      %s90 = sphi 0, %s92
      %s93 = sphi 0, %s90
      %s94 = sphi 0, %s93
      %s110 = sphi 0, %s94
    $region4: #{tpu_custom_call.1} parent=1 // loop_header_branch
      %15 = sbr.rel (%p13) target = $region8
    $region5: #{tpu_custom_call.1} parent=1 // loop_body
      %s17 = ssub.s32 %s12, 1
      %s18 = ssub.s32 %s12, 2
      %s19 = sadd.s32 %s12, 1
      %s20 = ssub.s32 %s12, %s19
      %p21 = scmp.eq.s32.totalorder %s20, 0
      %s23 = sadd.s32 %s22, 1
      %s24 = scalar_select %p21, %s22, %s23
      %p27 = pneg %p21
      %p28 = scmp.eq.s32.totalorder %s12, 1
      %p29 = por %p27, %p28
      %p30 = scmp.ne.s32.totalorder %s22, %s25
      %p31 = scmp.eq.s32.totalorder %s12, 0
      %p32 = por %p30, %p31
      %p33 = scmp.ne.s32.totalorder %s22, %s25
      %p34 = scmp.eq.s32.totalorder %s17, 1
      %p35 = por %p33, %p34
      %p36 = scmp.ne.s32.totalorder %s25, %s26
      %p37 = scmp.eq.s32.totalorder %s17, 0
      %p38 = por %p36, %p37
      %p39 = scmp.ne.s32.totalorder %s25, %s26
      %p40 = scmp.eq.s32.totalorder %s18, 1
      %p41 = por %p39, %p40
      %p43 = scmp.ne.s32.totalorder %s26, %s42
      %p44 = scmp.eq.s32.totalorder %s18, 0
      %p45 = por %p43, %p44
      %s47 = sadd.s32 %s46, 1
      %p50 = scmp.eq.s32.totalorder %s12, 1
      %p51 = scmp.ne.s32.totalorder %s46, %s48
      %p52 = scmp.eq.s32.totalorder %s12, 0
      %p53 = por %p51, %p52
      %p54 = scmp.ne.s32.totalorder %s46, %s48
      %p55 = scmp.eq.s32.totalorder %s17, 1
      %p56 = por %p54, %p55
      %p57 = scmp.ne.s32.totalorder %s48, %s49
      %p58 = scmp.eq.s32.totalorder %s17, 0
      %p59 = por %p57, %p58
      %p60 = scmp.ne.s32.totalorder %s48, %s49
      %p61 = scmp.eq.s32.totalorder %s18, 1
      %p62 = por %p60, %p61
      %p64 = scmp.ne.s32.totalorder %s49, %s63
      %p65 = scmp.eq.s32.totalorder %s18, 0
      %p66 = por %p64, %p65
      %s68 = sadd.s32 %s67, 1
      %p71 = scmp.eq.s32.totalorder %s12, 1
      %p72 = scmp.ne.s32.totalorder %s67, %s69
      %p73 = scmp.eq.s32.totalorder %s12, 0
      %p74 = por %p72, %p73
      %p75 = scmp.ne.s32.totalorder %s67, %s69
      %p76 = scmp.eq.s32.totalorder %s17, 1
      %p77 = por %p75, %p76
      %p78 = scmp.ne.s32.totalorder %s69, %s70
      %p79 = scmp.eq.s32.totalorder %s17, 0
      %p80 = por %p78, %p79
      %p81 = scmp.ne.s32.totalorder %s69, %s70
      %p82 = scmp.eq.s32.totalorder %s18, 1
      %p83 = por %p81, %p82
      %p85 = scmp.ne.s32.totalorder %s70, %s84
      %p86 = scmp.eq.s32.totalorder %s18, 0
      %p87 = por %p85, %p86
      %s88 = ssub.s32 %s12, %s19
      %p89 = scmp.eq.s32.totalorder %s88, 0
      %s91 = sadd.s32 %s90, 1
      %s92 = scalar_select %p89, %s90, %s91
      %p95 = pneg %p89
      %p96 = scmp.eq.s32.totalorder %s12, 1
      %p97 = por %p95, %p96
      %p98 = scmp.ne.s32.totalorder %s90, %s93
      %p99 = scmp.eq.s32.totalorder %s12, 0
      %p100 = por %p98, %p99
      %p101 = scmp.ne.s32.totalorder %s90, %s93
      %p102 = scmp.eq.s32.totalorder %s17, 1
      %p103 = por %p101, %p102
      %p104 = scmp.ne.s32.totalorder %s93, %s94
      %p105 = scmp.eq.s32.totalorder %s17, 0
      %p106 = por %p104, %p105
      %p107 = scmp.ne.s32.totalorder %s93, %s94
      %p108 = scmp.eq.s32.totalorder %s18, 1
      %p109 = por %p107, %p108
      %p111 = scmp.ne.s32.totalorder %s94, %s110
      %p112 = scmp.eq.s32.totalorder %s18, 0
      %p113 = por %p111, %p112
      %p114 = scmp.le.s32.totalorder 1, %s12
      %p115 = scmp.lt.s32.totalorder %s12, 3
      %p116 = pnand %p114, %p115
      %p117 = pneg %p116
      // Predicated region
      $region9: #{tpu_custom_call.1} parent=5 // pred_check
        _
      $region10: #{tpu_custom_call.1} parent=5 // pred_check_branch
        %119 = sbr.rel (%p116) target = $region12
      $region11: #{tpu_custom_call.1} parent=5 // pred_region
        %s120 = ssub.s32 %s12, 1
        // Predicated region
        $region13: #{tpu_custom_call.1} parent=11 // pred_check
          %p121 = pneg %p59
        $region14: #{tpu_custom_call.1} parent=11 // pred_check_branch
          %123 = sbr.rel (%p121) target = $region16
        $region15: #{tpu_custom_call.1} parent=11 // pred_region
          _
        $region16: #{tpu_custom_call.1} parent=11 // pred_fallthru
          _
        // Predicated region
        $region17: #{tpu_custom_call.1} parent=11 // pred_check
          %p124 = pneg %p80
        $region18: #{tpu_custom_call.1} parent=11 // pred_check_branch
          %126 = sbr.rel (%p124) target = $region20
        $region19: #{tpu_custom_call.1} parent=11 // pred_region
          _
        $region20: #{tpu_custom_call.1} parent=11 // pred_fallthru
          _
      $region12: #{tpu_custom_call.1} parent=5 // pred_fallthru
        _
      %p127 = scmp.lt.s32.totalorder %s12, 2
      // Predicated region
      $region21: #{tpu_custom_call.1} parent=5 // pred_check
        %p128 = pneg %p127
      $region22: #{tpu_custom_call.1} parent=5 // pred_check_branch
        %130 = sbr.rel (%p128) target = $region24
      $region23: #{tpu_custom_call.1} parent=5 // pred_region
        // Predicated region
        $region25: #{tpu_custom_call.1} parent=23 // pred_check
          %p131 = pneg %p32
        $region26: #{tpu_custom_call.1} parent=23 // pred_check_branch
          %133 = sbr.rel (%p131) target = $region28
        $region27: #{tpu_custom_call.1} parent=23 // pred_region
          %s134 = smul.u32 32, %s12
          %p135 = scmp.lt.s32.totalorder %s134, 63
          %s136 = scalar_select %p135, %s134, 63
          %s137 = smul.addr %s136, 8
          %s138 = scalar_lea.vmem %s0, %s137
          %s139 = smul.u32 32, %s12
        $region28: #{tpu_custom_call.1} parent=23 // pred_fallthru
          _
      $region24: #{tpu_custom_call.1} parent=5 // pred_fallthru
        _
      %p140 = scmp.le.s32.totalorder 1, %s12
      %p141 = scmp.lt.s32.totalorder %s12, 3
      %p142 = pnand %p140, %p141
      %p143 = pneg %p142
      // Predicated region
      $region29: #{tpu_custom_call.1} parent=5 // pred_check
        _
      $region30: #{tpu_custom_call.1} parent=5 // pred_check_branch
        %145 = sbr.rel (%p142) target = $region32
      $region31: #{tpu_custom_call.1} parent=5 // pred_region
        %s146 = ssub.s32 %s12, 1
        %s147 = smul.u32 32, %s17
        %p148 = scmp.lt.s32.totalorder %s147, 63
        %s149 = scalar_select %p148, %s147, 63
        %s150 = smul.addr %s149, 8
        %s151 = scalar_lea.vmem %s0, %s150
        %p152 = pneg %p38
        %p153 = pneg %p35
        %p154 = pneg %p59
        %p155 = pneg %p56
        %p156 = pneg %p80
        %p157 = pneg %p77
        %p158 = pneg %p106
        %p159 = pneg %p103
        %s160 = sand.u32 %s93, 1
        %s161 = scalar_lea.sflag [#allocation3], %s160
        %s162 = sand.u32 %s93, 1
        %s163 = smul.addr %s162, 16
        %s164 = scalar_lea.vmem [#allocation2], %s163
        %s165 = smul.u32 32, %s17
        %p166 = scmp.lt.s32.totalorder %s165, 63
        %s167 = scalar_select %p166, %s165, 63
        %s168 = smul.addr %s167, 8
        %s169 = scalar_lea.vmem %s0, %s168
        %s170 = smul.u32 32, %s17
        %s171 = smul.u32 2, %s17
        %v172 = vld [vmem:[%s1] sm:$0xff]
        %v173 = vld [vmem:[%s169] sm:$0xff]
        %v174 = vld [vmem:[%s169 + $0x8] sm:$0xff]
        %v175 = vld [vmem:[%s169 + $0x10] sm:$0xff]
        %v176 = vld [vmem:[%s169 + $0x18] sm:$0xff]
        %v177 = vld [vmem:[%s169 + $0x20] sm:$0xff]
        %v178 = vld [vmem:[%s169 + $0x28] sm:$0xff]
        %v179 = vld [vmem:[%s169 + $0x30] sm:$0xff]
        %v180 = vld [vmem:[%s169 + $0x38] sm:$0xff]
        %v181 = vld [vmem:[%s169 + $0x40] sm:$0xff]
        %v182 = vld [vmem:[%s169 + $0x48] sm:$0xff]
        %v183 = vld [vmem:[%s169 + $0x50] sm:$0xff]
        %v184 = vld [vmem:[%s169 + $0x58] sm:$0xff]
        %v185 = vld [vmem:[%s169 + $0x60] sm:$0xff]
        %v186 = vld [vmem:[%s169 + $0x68] sm:$0xff]
        %v187 = vld [vmem:[%s169 + $0x70] sm:$0xff]
        %v188 = vld [vmem:[%s169 + $0x78] sm:$0xff]
        %v189 = vld [vmem:[%s169 + $0x80] sm:$0xff]
        %v190 = vld [vmem:[%s169 + $0x88] sm:$0xff]
        %v191 = vld [vmem:[%s169 + $0x90] sm:$0xff]
        %v192 = vld [vmem:[%s169 + $0x98] sm:$0xff]
        %v193 = vld [vmem:[%s169 + $0xa0] sm:$0xff]
        %v194 = vld [vmem:[%s169 + $0xa8] sm:$0xff]
        %v195 = vld [vmem:[%s169 + $0xb0] sm:$0xff]
        %v196 = vld [vmem:[%s169 + $0xb8] sm:$0xff]
        %v197 = vld [vmem:[%s169 + $0xc0] sm:$0xff]
        %v198 = vld [vmem:[%s169 + $0xc8] sm:$0xff]
        %v199 = vld [vmem:[%s169 + $0xd0] sm:$0xff]
        %v200 = vld [vmem:[%s169 + $0xd8] sm:$0xff]
        %v201 = vld [vmem:[%s169 + $0xe0] sm:$0xff]
        %v202 = vld [vmem:[%s169 + $0xe8] sm:$0xff]
        %v203 = vld [vmem:[%s169 + $0xf0] sm:$0xff]
        %v204 = vld [vmem:[%s169 + $0xf8] sm:$0xff]
        %v205 = vld [vmem:[%s2] sm:$0xff]
        %207 = vset.pattern.permute.xlu0 0
        %208 = vperm.xlu0 %207, %v205
        %v209 = vpop.permute.xlu0 %208
        %vm211 = vcmask 261120
        %v213 = vsel %vm211, %v172, 0
        %v216 = vsel %vm211, %v173, 0
        %v219 = vsel %vm211, %v174, 0
        %v222 = vsel %vm211, %v175, 0
        %v225 = vsel %vm211, %v176, 0
        %v228 = vsel %vm211, %v177, 0
        %v231 = vsel %vm211, %v178, 0
        %v234 = vsel %vm211, %v179, 0
        %v237 = vsel %vm211, %v180, 0
        %v240 = vsel %vm211, %v181, 0
        %v243 = vsel %vm211, %v182, 0
        %v246 = vsel %vm211, %v183, 0
        %v249 = vsel %vm211, %v184, 0
        %v252 = vsel %vm211, %v185, 0
        %v255 = vsel %vm211, %v186, 0
        %v258 = vsel %vm211, %v187, 0
        %v261 = vsel %vm211, %v188, 0
        %v264 = vsel %vm211, %v189, 0
        %v267 = vsel %vm211, %v190, 0
        %v270 = vsel %vm211, %v191, 0
        %v273 = vsel %vm211, %v192, 0
        %v276 = vsel %vm211, %v193, 0
        %v279 = vsel %vm211, %v194, 0
        %v282 = vsel %vm211, %v195, 0
        %v285 = vsel %vm211, %v196, 0
        %v288 = vsel %vm211, %v197, 0
        %v291 = vsel %vm211, %v198, 0
        %v294 = vsel %vm211, %v199, 0
        %v297 = vsel %vm211, %v200, 0
        %v300 = vsel %vm211, %v201, 0
        %v303 = vsel %vm211, %v202, 0
        %v306 = vsel %vm211, %v203, 0
        %v309 = vsel %vm211, %v204, 0
        %311 = vmatprep.subr.mxu0 0.0
        %312 = vmatpush1.xpose.msra.mxu0 %v216
        %313 = vmatprep.subr.mxu0 0.0
        %314 = vmatpush1.xpose.msra.mxu0 %v219
        %315 = vmatprep.subr.mxu0 0.0
        %316 = vmatpush1.xpose.msra.mxu0 %v222
        %317 = vmatprep.subr.mxu0 0.0
        %318 = vmatpush1.xpose.msra.mxu0 %v225
        %319 = vmatprep.subr.mxu0 0.0
        %320 = vmatpush1.xpose.msra.mxu0 %v228
        %321 = vmatprep.subr.mxu0 0.0
        %322 = vmatpush1.xpose.msra.mxu0 %v231
        %323 = vmatprep.subr.mxu0 0.0
        %324 = vmatpush1.xpose.msra.mxu0 %v234
        %325 = vmatprep.subr.mxu0 0.0
        %326 = vmatpush1.xpose.msra.mxu0 %v237
        %327 = vmatprep.subr.mxu0 0.0
        %328 = vmatpush1.xpose.msra.mxu0 %v240
        %329 = vmatprep.subr.mxu0 0.0
        %330 = vmatpush1.xpose.msra.mxu0 %v243
        %331 = vmatprep.subr.mxu0 0.0
        %332 = vmatpush1.xpose.msra.mxu0 %v246
        %333 = vmatprep.subr.mxu0 0.0
        %334 = vmatpush1.xpose.msra.mxu0 %v249
        %335 = vmatprep.subr.mxu0 0.0
        %336 = vmatpush1.xpose.msra.mxu0 %v252
        %337 = vmatprep.subr.mxu0 0.0
        %338 = vmatpush1.xpose.msra.mxu0 %v255
        %339 = vmatprep.subr.mxu0 0.0
        %340 = vmatpush1.xpose.msra.mxu0 %v258
        %341 = vmatprep.subr.mxu0 0.0
        %342 = vmatpush1.xpose.msra.mxu0 %v261
        %343 = vmatprep.subr.mxu0 0.0
        %344 = vmatpush1.xpose.msra.mxu0 %v264
        %345 = vmatprep.subr.mxu0 0.0
        %346 = vmatpush1.xpose.msra.mxu0 %v267
        %347 = vmatprep.subr.mxu0 0.0
        %348 = vmatpush1.xpose.msra.mxu0 %v270
        %349 = vmatprep.subr.mxu0 0.0
        %350 = vmatpush1.xpose.msra.mxu0 %v273
        %351 = vmatprep.subr.mxu0 0.0
        %352 = vmatpush1.xpose.msra.mxu0 %v276
        %353 = vmatprep.subr.mxu0 0.0
        %354 = vmatpush1.xpose.msra.mxu0 %v279
        %355 = vmatprep.subr.mxu0 0.0
        %356 = vmatpush1.xpose.msra.mxu0 %v282
        %357 = vmatprep.subr.mxu0 0.0
        %358 = vmatpush1.xpose.msra.mxu0 %v285
        %359 = vmatprep.subr.mxu0 0.0
        %360 = vmatpush1.xpose.msra.mxu0 %v288
        %361 = vmatprep.subr.mxu0 0.0
        %362 = vmatpush1.xpose.msra.mxu0 %v291
        %363 = vmatprep.subr.mxu0 0.0
        %364 = vmatpush1.xpose.msra.mxu0 %v294
        %365 = vmatprep.subr.mxu0 0.0
        %366 = vmatpush1.xpose.msra.mxu0 %v297
        %367 = vmatprep.subr.mxu0 0.0
        %368 = vmatpush1.xpose.msra.mxu0 %v300
        %369 = vmatprep.subr.mxu0 0.0
        %370 = vmatpush1.xpose.msra.mxu0 %v303
        %371 = vmatprep.subr.mxu0 0.0
        %372 = vmatpush1.xpose.msra.mxu0 %v306
        %373 = vmatprep.subr.mxu0 0.0
        %374 = vmatpush1.xpose.msra.mxu0 %v309
        %375 = vmatprep.mubr.f32.mxu0 0.0
        %376 = vmatmul.mubr.f32.gmra.mrb[0].mxu0 %v213
        %v377 = vpop.f32.mrb[0].mxu0
        %v378 = vadd.f32 %v209, %v377
        %v379 = vpop.f32.mrb[0].mxu0
        %v380 = vadd.f32 %v209, %v379
        %381 = vdwg.mxu0
        %382 = vst [vmem:[%s164] sm:$0xff] %v378
        %383 = vst [vmem:[%s164 + $0x8] sm:$0xff] %v380
        %s384 = sand.u32 %s93, 1
        %s385 = scalar_lea.sflag [#allocation3], %s384
        %s386 = sand.u32 %s93, 1
        %s387 = smul.addr %s386, 16
        %s388 = scalar_lea.vmem [#allocation2], %s387
        // Predicated region
        $region33: #{tpu_custom_call.1} parent=31 // pred_check
          %p389 = pneg %p103
        $region34: #{tpu_custom_call.1} parent=31 // pred_check_branch
          %391 = sbr.rel (%p389) target = $region36
        $region35: #{tpu_custom_call.1} parent=31 // pred_region
          %s392 = smul.u32 2, %s17
          %s394 = ssub.s32 256, 256
          %395 = vsyncadd %s385, %s394
          %s396 = smul.addr %s392, 128
          %s397 = scalar_lea.hbm %s3, %s396
          %s399 = sshll.u32 %s388, 4
          %s400 = int_to_ptr.vmem [resolvable:$true] %s399
          %402 = dma.vmem_to_hbm [thread:$0]  %s400, 256, %s397, %s385
        $region36: #{tpu_custom_call.1} parent=31 // pred_fallthru
          _
      $region32: #{tpu_custom_call.1} parent=5 // pred_fallthru
        _
      %p403 = scmp.le.s32.totalorder 2, %s12
      // Predicated region
      $region37: #{tpu_custom_call.1} parent=5 // pred_check
        %p404 = pneg %p403
      $region38: #{tpu_custom_call.1} parent=5 // pred_check_branch
        %406 = sbr.rel (%p404) target = $region40
      $region39: #{tpu_custom_call.1} parent=5 // pred_region
        %s407 = ssub.s32 %s12, 2
        // Predicated region
        $region41: #{tpu_custom_call.1} parent=39 // pred_check
          %p408 = pneg %p109
        $region42: #{tpu_custom_call.1} parent=39 // pred_check_branch
          %410 = sbr.rel (%p408) target = $region44
        $region43: #{tpu_custom_call.1} parent=39 // pred_region
          %s411 = sand.u32 %s94, 1
          %s412 = scalar_lea.sflag [#allocation3], %s411
          %s413 = sand.u32 %s94, 1
          %s414 = smul.addr %s413, 16
          %s415 = scalar_lea.vmem [#allocation2], %s414
          %416 = dma.done %s412, 256
        $region44: #{tpu_custom_call.1} parent=39 // pred_fallthru
          _
      $region40: #{tpu_custom_call.1} parent=5 // pred_fallthru
        _
    $region6: #{tpu_custom_call.1} parent=1 // loop_footer
      %s16 = sadd.s32 1, %s12
    $region7: #{tpu_custom_call.1} parent=1 // loop_footer_branch
      %11 = sbr.rel target = $region3
    $region8: #{tpu_custom_call.1} parent=1 // loop_exit
      _
    %417 = vsyncpa [#allocation3], 1
    %s418 = scalar_lea.sflag [#allocation3], 1
    %419 = vsyncpa %s418, 1

</llo_original>
